<compile_context>
chip_gen: v7x
topology: tpu7x:2x2x1
jax: 0.10.0
libtpu: 0.0.40
codegen_flags: <defaults>
</compile_context>

<pallas_src>
import functools

import jax
import jax.numpy as jnp
from jax.experimental import pallas as pl
from jax.experimental.pallas import tpu as pltpu

LANES = 128
SUBLANES = 8
DEFAULT_TILE_ROWS = 2048  # 2048*128*4B = 1 MiB per f32 input per pipeline buffer


def _wmae_kernel(x_ref, t_ref, w_ref, out_ref, *, rows_valid, need_mask):
    """Accumulate per-lane partial sums of weight*|x-t| into out_ref (8,128)."""
    j = pl.program_id(1)

    @pl.when(j == 0)
    def _():
        out_ref[...] = jnp.zeros_like(out_ref)

    # Cast in-kernel (keeps HBM traffic at the native input width).
    x = x_ref[...].astype(jnp.float32)
    t = t_ref[...].astype(jnp.float32)
    w = w_ref[...].astype(jnp.float32)
    contrib = w * jnp.abs(x - t)

    block_rows = x_ref.shape[0]
    if need_mask:
        # Logical row index (independent of Pallas block-index clamping), so
        # ragged last blocks and clamped overflow blocks contribute zero.
        blk = pl.program_id(0) * pl.num_programs(1) + j
        row_ids = blk * block_rows + jax.lax.broadcasted_iota(
            jnp.int32, (block_rows, LANES), 0)
        contrib = jnp.where(row_ids < rows_valid, contrib, 0.0)

    # Keep the accumulator vreg-shaped: the reshape does not cross (8,128) tile
    # boundaries, and the sum over axis 0 is just vreg-wise VPU adds; the
    # expensive cross-lane reduce happens exactly once, outside the kernel.
    out_ref[...] += contrib.reshape(
        block_rows // SUBLANES, SUBLANES, LANES).sum(axis=0)


def weighted_mae_loss(inp, target, weight, *, tile_rows=DEFAULT_TILE_ROWS):
    """mean(weight * |inp - target|) over all elements, computed on TPU."""
    assert inp.shape == target.shape == weight.shape
    assert tile_rows >= SUBLANES and tile_rows % SUBLANES == 0
    n_true = inp.size
    if n_true == 0:
        # torch.mean of an empty tensor is NaN.
        return jnp.float32(jnp.nan)

    x = inp.reshape(-1)
    t = target.reshape(-1)
    w = weight.reshape(-1)

    # Tiny zero pad (< 1024 elements) only when the flat size is ragged; padded
    # elements contribute 0 to the sum (0 * |0 - 0|).
    chunk = SUBLANES * LANES
    n_pad = (-n_true) % chunk
    if n_pad:
        x = jnp.pad(x, (0, n_pad))
        t = jnp.pad(t, (0, n_pad))
        w = jnp.pad(w, (0, n_pad))

    rows = (n_true + n_pad) // LANES  # always a multiple of 8
    x = x.reshape(rows, LANES)
    t = t.reshape(rows, LANES)
    w = w.reshape(rows, LANES)

    block_rows = min(tile_rows, rows)          # multiple of 8 (or the full dim)
    num_blocks = pl.cdiv(rows, block_rows)
    num_partials = 2 if num_blocks >= 2 else 1  # shard rows across v7x's 2 TCs
    steps = pl.cdiv(num_blocks, num_partials)
    # Mask needed iff the (partials x steps) sweep covers more rows than exist
    # (ragged last block and/or clamped overflow blocks of the short partial).
    need_mask = (num_partials * steps * block_rows) != rows

    tile_spec = pl.BlockSpec((block_rows, LANES),
                             lambda p, j: (p * steps + j, 0))
    out_spec = pl.BlockSpec((SUBLANES, LANES), lambda p, j: (p, 0))

    partials = pl.pallas_call(
        functools.partial(_wmae_kernel, rows_valid=rows, need_mask=need_mask),
        out_shape=jax.ShapeDtypeStruct((num_partials * SUBLANES, LANES),
                                       jnp.float32),
        grid_spec=pltpu.PrefetchScalarGridSpec(
            num_scalar_prefetch=0,
            grid=(num_partials, steps),
            in_specs=[tile_spec, tile_spec, tile_spec],
            out_specs=out_spec,
        ),
        compiler_params=pltpu.CompilerParams(
            dimension_semantics=("parallel", "arbitrary"),
        ),
    )(x, t, w)

    # Single tiny cross-lane reduction + mean outside the kernel.
    return jnp.sum(partials) / n_true


if __name__ == "__main__":
    key = jax.random.PRNGKey(0)

    def ref_loss(i, t, w):
        i32 = i.astype(jnp.float32)
        t32 = t.astype(jnp.float32)
        w32 = w.astype(jnp.float32)
        return jnp.mean(w32 * jnp.abs(i32 - t32))

    tests = [
        # (shape, dtype, tile_rows, tol)
        ((2, 4, 16, 16), jnp.float32, DEFAULT_TILE_ROWS, 1e-5),   # NCHW, 1 block
        ((3, 5, 17, 31), jnp.float32, DEFAULT_TILE_ROWS, 1e-5),   # ragged -> pad
        ((5, 8, 128), jnp.float32, 16, 1e-5),    # multi-block, 2 partials + mask
        ((2, 4, 16, 16), jnp.bfloat16, DEFAULT_TILE_ROWS, 2e-2),  # in-kernel cast
    ]
    for shape, dtype, tile_rows, tol in tests:
        key, k1, k2, k3 = jax.random.split(key, 4)
        inp = jax.random.normal(k1, shape, dtype=jnp.float32).astype(dtype)
        target = jax.random.normal(k2, shape, dtype=jnp.float32).astype(dtype)
        weight = jax.random.uniform(k3, shape, dtype=jnp.float32).astype(dtype)

        loss = weighted_mae_loss(inp, target, weight, tile_rows=tile_rows)
        jax.block_until_ready(loss)

        expect = ref_loss(inp, target, weight)
        assert jnp.allclose(loss, expect, rtol=tol, atol=tol), (
            shape, str(dtype), float(loss), float(expect))

    print("KERNEL_OK")
</pallas_src>

<mosaic_0001>
module attributes {stable_mosaic.version = 11 : i64} {
  func.func @_wmae_kernel(%arg0: i32, %arg1: i32, %arg2: memref<16x128xf32, #tpu.memory_space<vmem>>, %arg3: memref<16x128xf32, #tpu.memory_space<vmem>>, %arg4: memref<16x128xf32, #tpu.memory_space<vmem>>, %arg5: memref<8x128xf32, #tpu.memory_space<vmem>>) attributes {dimension_semantics = [#tpu.dimension_semantics<parallel>, #tpu.dimension_semantics<arbitrary>], iteration_bounds = array<i64: 1, 1>, scalar_prefetch = 0 : i64, scratch_operands = 0 : i64, tpu.core_type = #tpu.core_type<tc>, window_params = [{transform_indices = @transform_0, window_bounds = array<i64: 16, 128>}, {transform_indices = @transform_1, window_bounds = array<i64: 16, 128>}, {transform_indices = @transform_2, window_bounds = array<i64: 16, 128>}, {transform_indices = @transform_3, window_bounds = array<i64: 8, 128>}]} {
    %c0_i32 = arith.constant 0 : i32
    %0 = arith.cmpi eq, %arg1, %c0_i32 : i32
    %1 = arith.extui %0 : i1 to i32
    %c0_i32_0 = arith.constant 0 : i32
    %2 = arith.cmpi ne, %1, %c0_i32_0 : i32
    scf.if %2 {
      %cst_10 = arith.constant 0.000000e+00 : f32
      %14 = vector.broadcast %cst_10 : f32 to vector<8x128xf32>
      %c0_11 = arith.constant 0 : index
      %c0_12 = arith.constant 0 : index
      %15 = vector.load %arg5[%c0_11, %c0_12] : memref<8x128xf32, #tpu.memory_space<vmem>>, vector<8x128xf32>
      tpu.vector_store %arg5[%c0_11, %c0_12], %14 {strides = array<i32>} : memref<8x128xf32, #tpu.memory_space<vmem>>, vector<8x128xf32>,
    } else {
    }
    %c0 = arith.constant 0 : index
    %c0_1 = arith.constant 0 : index
    %3 = vector.load %arg2[%c0, %c0_1] : memref<16x128xf32, #tpu.memory_space<vmem>>, vector<16x128xf32>
    %c0_2 = arith.constant 0 : index
    %c0_3 = arith.constant 0 : index
    %4 = vector.load %arg3[%c0_2, %c0_3] : memref<16x128xf32, #tpu.memory_space<vmem>>, vector<16x128xf32>
    %c0_4 = arith.constant 0 : index
    %c0_5 = arith.constant 0 : index
    %5 = vector.load %arg4[%c0_4, %c0_5] : memref<16x128xf32, #tpu.memory_space<vmem>>, vector<16x128xf32>
    %6 = arith.subf %3, %4 : vector<16x128xf32>
    %7 = math.absf %6 : vector<16x128xf32>
    %8 = arith.mulf %5, %7 : vector<16x128xf32>
    %c0_6 = arith.constant 0 : index
    %c0_7 = arith.constant 0 : index
    %9 = vector.load %arg5[%c0_6, %c0_7] : memref<8x128xf32, #tpu.memory_space<vmem>>, vector<8x128xf32>
    %10 = vector.shape_cast %8 : vector<16x128xf32> to vector<2x8x128xf32>
    %cst = arith.constant dense<0.000000e+00> : vector<8x128xf32>
    %11 = vector.multi_reduction <add>, %10, %cst [0] : vector<2x8x128xf32> to vector<8x128xf32>
    %12 = arith.addf %9, %11 : vector<8x128xf32>
    %c0_8 = arith.constant 0 : index
    %c0_9 = arith.constant 0 : index
    %13 = vector.load %arg5[%c0_8, %c0_9] : memref<8x128xf32, #tpu.memory_space<vmem>>, vector<8x128xf32>
    tpu.vector_store %arg5[%c0_8, %c0_9], %12 {strides = array<i32>} : memref<8x128xf32, #tpu.memory_space<vmem>>, vector<8x128xf32>,
    return
  }
  func.func @transform_0(%arg0: i32, %arg1: i32) -> (i32, i32) {
    %c1_i32 = arith.constant 1 : i32
    %0 = arith.muli %arg0, %c1_i32 : i32
    %1 = arith.addi %0, %arg1 : i32
    %c0_i32 = arith.constant 0 : i32
    %c0_i32_0 = arith.constant 0 : i32
    return %1, %c0_i32 : i32, i32
  }
  func.func @transform_1(%arg0: i32, %arg1: i32) -> (i32, i32) {
    %c1_i32 = arith.constant 1 : i32
    %0 = arith.muli %arg0, %c1_i32 : i32
    %1 = arith.addi %0, %arg1 : i32
    %c0_i32 = arith.constant 0 : i32
    %c0_i32_0 = arith.constant 0 : i32
    return %1, %c0_i32 : i32, i32
  }
  func.func @transform_2(%arg0: i32, %arg1: i32) -> (i32, i32) {
    %c1_i32 = arith.constant 1 : i32
    %0 = arith.muli %arg0, %c1_i32 : i32
    %1 = arith.addi %0, %arg1 : i32
    %c0_i32 = arith.constant 0 : i32
    %c0_i32_0 = arith.constant 0 : i32
    return %1, %c0_i32 : i32, i32
  }
  func.func @transform_3(%arg0: i32, %arg1: i32) -> (i32, i32) {
    %c0_i32 = arith.constant 0 : i32
    %c0_i32_0 = arith.constant 0 : i32
    return %arg0, %c0_i32 : i32, i32
  }
}

</mosaic_0001>

<llo_original>
// kernel: tpu_custom_call.1
$region0: #{tpu_custom_call.1}
  #allocation0 [shape = 'u32[]', space=smem, size = 0x4, offset = 0x4, fixed_abs, tag = 'smem constant byte address 0x4 - core index']
  #allocation1 [shape = 'u32[144,128]{1,0:T(1,128)}', space=vmem, size = 0x12000, scoped, tag = 'internal scratch']
  %s0 = inlined_call_operand.hbm [shape: f32[16,128], index: 0, kind: input, shape index: {}]
  %s1 = inlined_call_operand.hbm [shape: f32[16,128], index: 1, kind: input, shape index: {}]
  %s2 = inlined_call_operand.hbm [shape: f32[16,128], index: 2, kind: input, shape index: {}]
  %s3 = inlined_call_operand.hbm [shape: f32[8,128], index: 3, kind: output, shape index: {}]
  %s4 = sld [smem:[#allocation0]]
  $region38: #{tpu_custom_call.1} parent=0
    _
  %s6 = ssub.s32 1, %s4
  %s7 = scalar_select 0, %s6, %s4
  $region1: #{tpu_custom_call.1} parent=0
    #allocation2 [shape = 'u8[8192]{0}', space=vmem, size = 0x2000, scoped, tag = 'input window, operand 0, single buffered']
    #allocation3 [shape = 's32[1]{0}', space=sflag, size = 0x4, scoped, tag = 'scoped memory for tpu_custom_call.1']
    #allocation4 [shape = 's32[1]{0}', space=sflag, size = 0x4, scoped, tag = 'scoped memory for tpu_custom_call.1']
    #allocation5 [shape = 'u8[8192]{0}', space=vmem, size = 0x2000, scoped, tag = 'input window, operand 1, single buffered']
    #allocation6 [shape = 's32[1]{0}', space=sflag, size = 0x4, scoped, tag = 'scoped memory for tpu_custom_call.1']
    #allocation7 [shape = 'u8[8192]{0}', space=vmem, size = 0x2000, scoped, tag = 'input window, operand 2, single buffered']
    #allocation8 [shape = 'u8[4096]{0}', space=vmem, size = 0x1000, scoped, tag = 'output window, operand 0, single buffered']
    %8 = vsyncpa [#allocation3], 0
    %9 = vsyncpa [#allocation6], 0
    %10 = vsyncpa [#allocation4], 0
    // Predicated region
    $region2: #{tpu_custom_call.1} parent=1 // pred_check
      _
    $region3: #{tpu_custom_call.1} parent=1 // pred_check_branch
      %12 = sbr.rel (0) target = $region5
    $region4: #{tpu_custom_call.1} parent=1 // pred_region
      %s13 = sadd.s32 0, 0
      %s14 = smul.u32 2, %s13
      %s16 = ssub.s32 256, 256
      %17 = vsyncadd [#allocation3], %s16
      %s18 = smul.addr %s14, 128
      %s19 = scalar_lea.hbm %s0, %s18
      %s20 = sshll.u32 [#allocation2], 4
      %s21 = int_to_ptr.vmem [resolvable:$true] %s20
      %26 = dma.hbm_to_vmem [thread:$0]  %s19, 256, %s21, [#allocation3], 128, 128, 8
    $region5: #{tpu_custom_call.1} parent=1 // pred_fallthru
      _
    // Predicated region
    $region6: #{tpu_custom_call.1} parent=1 // pred_check
      _
    $region7: #{tpu_custom_call.1} parent=1 // pred_check_branch
      %28 = sbr.rel (0) target = $region9
    $region8: #{tpu_custom_call.1} parent=1 // pred_region
      %s29 = sadd.s32 0, 0
      %s30 = smul.u32 2, %s29
      %s32 = ssub.s32 256, 256
      %33 = vsyncadd [#allocation6], %s32
      %s34 = smul.addr %s30, 128
      %s35 = scalar_lea.hbm %s1, %s34
      %s36 = sshll.u32 [#allocation5], 4
      %s37 = int_to_ptr.vmem [resolvable:$true] %s36
      %42 = dma.hbm_to_vmem [thread:$0]  %s35, 256, %s37, [#allocation6], 128, 128, 8
    $region9: #{tpu_custom_call.1} parent=1 // pred_fallthru
      _
    // Predicated region
    $region10: #{tpu_custom_call.1} parent=1 // pred_check
      _
    $region11: #{tpu_custom_call.1} parent=1 // pred_check_branch
      %44 = sbr.rel (0) target = $region13
    $region12: #{tpu_custom_call.1} parent=1 // pred_region
      %s45 = sadd.s32 0, 0
      %s46 = smul.u32 2, %s45
      %s48 = ssub.s32 256, 256
      %49 = vsyncadd [#allocation6], %s48
      %s50 = smul.addr %s46, 128
      %s51 = scalar_lea.hbm %s2, %s50
      %s52 = sshll.u32 [#allocation7], 4
      %s53 = int_to_ptr.vmem [resolvable:$true] %s52
      %58 = dma.hbm_to_vmem [thread:$0]  %s51, 256, %s53, [#allocation6], 128, 128, 8
    $region13: #{tpu_custom_call.1} parent=1 // pred_fallthru
      _
    // Predicated region
    $region14: #{tpu_custom_call.1} parent=1 // pred_check
      _
    $region15: #{tpu_custom_call.1} parent=1 // pred_check_branch
      %60 = sbr.rel (0) target = $region17
    $region16: #{tpu_custom_call.1} parent=1 // pred_region
      %61 = dma.done [#allocation3], 256
    $region17: #{tpu_custom_call.1} parent=1 // pred_fallthru
      _
    // Predicated region
    $region18: #{tpu_custom_call.1} parent=1 // pred_check
      _
    $region19: #{tpu_custom_call.1} parent=1 // pred_check_branch
      %63 = sbr.rel (0) target = $region21
    $region20: #{tpu_custom_call.1} parent=1 // pred_region
      %64 = dma.done [#allocation6], 256
    $region21: #{tpu_custom_call.1} parent=1 // pred_fallthru
      _
    // Predicated region
    $region22: #{tpu_custom_call.1} parent=1 // pred_check
      _
    $region23: #{tpu_custom_call.1} parent=1 // pred_check_branch
      %66 = sbr.rel (0) target = $region25
    $region24: #{tpu_custom_call.1} parent=1 // pred_region
      %67 = dma.done [#allocation6], 256
    $region25: #{tpu_custom_call.1} parent=1 // pred_fallthru
      _
    %s68 = sadd.s32 0, 0
    %s69 = smul.u32 2, %s68
    %s70 = sadd.s32 0, 0
    %s71 = smul.u32 2, %s70
    %s72 = sadd.s32 0, 0
    %s73 = smul.u32 2, %s72
    %p74 = scmp.eq.s32.totalorder 0, 0
    // Predicated region
    $region26: #{tpu_custom_call.1} parent=1 // pred_check
      %p75 = pneg %p74
    $region27: #{tpu_custom_call.1} parent=1 // pred_check_branch
      %77 = sbr.rel (%p75) target = $region29
    $region28: #{tpu_custom_call.1} parent=1 // pred_region
      %78 = vst [vmem:[#allocation8] sm:$0xff] 0.0
    $region29: #{tpu_custom_call.1} parent=1 // pred_fallthru
      _
    %v79 = vld [vmem:[#allocation2] sm:$0xff]
    %v80 = vld [vmem:[#allocation2 + $0x8] sm:$0xff]
    %v81 = vld [vmem:[#allocation5] sm:$0xff]
    %v82 = vld [vmem:[#allocation5 + $0x8] sm:$0xff]
    %v83 = vld [vmem:[#allocation7] sm:$0xff]
    %v84 = vld [vmem:[#allocation7 + $0x8] sm:$0xff]
    %v85 = vsub.f32 %v79, %v81
    %v86 = vsub.f32 %v80, %v82
    %v87 = vand.u32 2147483647, %v85
    %v88 = vand.u32 2147483647, %v86
    %v89 = vmul.f32 %v83, %v87
    %v90 = vmul.f32 %v84, %v88
    %v91 = vld [vmem:[#allocation8] sm:$0xff]
    %v92 = vadd.f32 %v89, %v90
    %v93 = vadd.f32 %v91, %v92
    %94 = vst [vmem:[#allocation8] sm:$0xff] %v93
    // Predicated region
    $region30: #{tpu_custom_call.1} parent=1 // pred_check
      _
    $region31: #{tpu_custom_call.1} parent=1 // pred_check_branch
      %96 = sbr.rel (0) target = $region33
    $region32: #{tpu_custom_call.1} parent=1 // pred_region
      %s98 = ssub.s32 128, 128
      %99 = vsyncadd [#allocation4], %s98
      %s101 = sshll.u32 [#allocation8], 4
      %s102 = int_to_ptr.vmem [resolvable:$true] %s101
      %104 = dma.vmem_to_hbm [thread:$0]  %s102, 128, %s3, [#allocation4]
    $region33: #{tpu_custom_call.1} parent=1 // pred_fallthru
      _
    // Predicated region
    $region34: #{tpu_custom_call.1} parent=1 // pred_check
      _
    $region35: #{tpu_custom_call.1} parent=1 // pred_check_branch
      %106 = sbr.rel (0) target = $region37
    $region36: #{tpu_custom_call.1} parent=1 // pred_region
      %107 = dma.done [#allocation4], 128
    $region37: #{tpu_custom_call.1} parent=1 // pred_fallthru
      _
    %108 = vsyncpa [#allocation3], 1
    %109 = vsyncpa [#allocation6], 1
    %110 = vsyncpa [#allocation4], 1

</llo_original>
